<compile_context>
chip_gen: v7x
topology: tpu7x:2x2x1
jax: 0.10.0
libtpu: 0.0.40
codegen_flags: <defaults>
</compile_context>

<pallas_src>
import functools

import jax
import jax.numpy as jnp
from jax.experimental import pallas as pl
from jax.experimental.pallas import tpu as pltpu

EPS = 1e-5
MOMENTUM = 0.1


def _pick_lane_pack(H, W):
    """Smallest k with k | H and (k*W) % 128 == 0 so the packed last dim is lane-dense."""
    if W % 128 == 0:
        return 1
    for k in range(2, H + 1):
        if H % k == 0 and (k * W) % 128 == 0:
            return k
    # TODO(synk): for awkward W with no packing factor, pad W up to a multiple of
    # 128 (lane-masked stats) instead of falling back to masked partial stores.
    return 1


def _device_vmem_bytes():
    try:
        return int(pltpu.get_tpu_info().vmem_capacity_bytes)
    except Exception:
        return 64 * 1024 * 1024  # conservative default (v7x-class)


def _bn_train_kernel(inv_sf_ref, x_ref, rm_ref, rv_ref, g_ref, b_ref,
                     out_ref, nrm_ref, nrv_ref, *, k, count):
    """One channel-block per grid step.

    x_ref:                (N, Cb, Hk, k*W)  lane-packed input view
    rm/rv/g/b, nrm/nrv:   (Cb, 1, W)        per-channel params / updated stats
    """
    inv_sf = inv_sf_ref[0]                          # scalar 1/sum(nframes) (SMEM)
    xf = x_ref[...].astype(jnp.float32)             # f32 accumulation (no-op for f32 x)
    kw = xf.shape[-1]
    w = kw // k

    # One-pass statistics: Σx and Σx² over batch (N) and frame (Hk) axes,
    # then fold the k lane groups back onto the original W positions.
    s = jnp.sum(jnp.sum(xf, axis=0), axis=1, keepdims=True)         # (Cb, 1, kW)
    ssq = jnp.sum(jnp.sum(xf * xf, axis=0), axis=1, keepdims=True)  # (Cb, 1, kW)

    def fold(t):                                    # (Cb, 1, kW) -> (Cb, 1, W)
        acc = t[..., 0:w]
        for g in range(1, k):
            acc = acc + t[..., g * w:(g + 1) * w]
        return acc

    def tile(t):                                    # (Cb, 1, W) -> (Cb, 1, kW)
        if k == 1:
            return t
        return jnp.concatenate([t] * k, axis=-1)

    mean = fold(s) * inv_sf                         # (Cb, 1, W)
    ex2 = fold(ssq) * inv_sf
    # sum((x - mean)^2)/sf == ssq/sf + mean^2 * (count/sf - 2)   (count = N*H)
    var = ex2 + mean * mean * (count * inv_sf - 2.0)

    new_rm = (1.0 - MOMENTUM) * rm_ref[...] + MOMENTUM * mean
    new_rv = (1.0 - MOMENTUM) * rv_ref[...] + MOMENTUM * var
    nrm_ref[...] = new_rm
    nrv_ref[...] = new_rv

    # Fold normalization into a per-channel affine computed on tiny tiles.
    scale = g_ref[...] * jax.lax.rsqrt(new_rv + EPS)     # (Cb, 1, W)
    shift = b_ref[...] - new_rm * scale
    # (Cb, 1, kW) broadcasts against (N, Cb, Hk, kW): per-channel over N and frames.
    out_ref[...] = (xf * tile(scale) + tile(shift)).astype(out_ref.dtype)


def _bn_eval_kernel(x_ref, scale_ref, shift_ref, out_ref):
    # scale/shift are precomputed (param-sized) and already lane-tiled: (Cb, 1, kW).
    xf = x_ref[...].astype(jnp.float32)
    out_ref[...] = (xf * scale_ref[...] + shift_ref[...]).astype(out_ref.dtype)


def voice_batch_norm_2d(x, nframes, running_means, running_vars, gamma, beta,
                        training=True):
    """x: (N, C, H, W); params: (1, C, 1, W) float32.

    Returns (out, new_running_means, new_running_vars), matching the PyTorch
    module's forward (training path updates running stats, then normalizes with
    the *updated* running stats, exactly as the reference does).
    """
    N, C, H, W = x.shape

    # Lane-packing: fold k frame rows into the lane axis so the last dim is a
    # multiple of 128 (dense vregs, unmasked stores).  Free row-major view.
    k = _pick_lane_pack(H, W)
    Hk = H // k
    kW = k * W
    x_v = x.reshape(N, C, Hk, kW)

    # ---- generation-aware block sizing ---------------------------------------
    vmem_cap = _device_vmem_bytes()
    if vmem_cap <= 64 * 1024 * 1024:
        # v7x-class: 64 MiB VMEM per TensorCore, 2 TCs per chip.
        vmem_limit = 48 * 1024 * 1024
        per_buf_cap = 6 * 1024 * 1024
        multi_core = True
    else:
        # v5e / v6e: 128 MiB VMEM, single TensorCore.
        vmem_limit = 100 * 1024 * 1024
        per_buf_cap = 14 * 1024 * 1024
        multi_core = False
    headroom = 4 * 1024 * 1024
    # ~6 block-sized buffers live at once (in/out double-buffered + f32 temps).
    per_buf = max(1 * 1024 * 1024, min(per_buf_cap, (vmem_limit - headroom) // 6))

    bytes_per_channel = N * H * W * 4               # f32 accumulation footprint
    # TODO(synk): add a second ("arbitrary") grid axis over Hk with scratch
    # accumulators once a single channel exceeds the per-buffer budget (v7x).
    Cb = max(1, min(C, per_buf // max(bytes_per_channel, 1)))
    nb = pl.cdiv(C, Cb)
    if multi_core and C >= 2:
        # >= 2 (even) channel-block steps so both v7x TensorCores get work.
        if nb < 2:
            nb = 2
        elif nb % 2:
            nb += 1
        nb = min(nb, C)
        Cb = pl.cdiv(C, nb)
    nb = pl.cdiv(C, Cb)                             # padded channel grid (no divisor search)
    C_pad = nb * Cb
    grid = (nb,)

    xspec = pl.BlockSpec((N, Cb, Hk, kW), lambda c: (0, c, 0, 0))
    cparams = pltpu.CompilerParams(
        dimension_semantics=("parallel",),
        vmem_limit_bytes=int(vmem_limit),
    )

    if training:
        inv_sf = (1.0 / jnp.sum(jnp.asarray(nframes, jnp.float32))).reshape(1)

        def prep(p, pad_val):
            # (1, C, 1, W) -> compact (C_pad, 1, W); pad channels never reach real output.
            p3 = p.reshape(C, 1, W).astype(jnp.float32)
            if C_pad != C:
                p3 = jnp.pad(p3, ((0, C_pad - C), (0, 0), (0, 0)),
                             constant_values=pad_val)
            return p3

        rm3 = prep(running_means, 0.0)
        rv3 = prep(running_vars, 1.0)
        g3 = prep(gamma, 1.0)
        b3 = prep(beta, 0.0)

        pspec = pl.BlockSpec((Cb, 1, W), lambda c: (c, 0, 0))

        out_v, nrm3, nrv3 = pl.pallas_call(
            functools.partial(_bn_train_kernel, k=k, count=float(N * H)),
            grid=grid,
            in_specs=[
                pl.BlockSpec(memory_space=pltpu.MemorySpace.SMEM),  # inv_sf scalar
                xspec, pspec, pspec, pspec, pspec,
            ],
            out_specs=(xspec, pspec, pspec),
            out_shape=(
                jax.ShapeDtypeStruct((N, C, Hk, kW), x.dtype),
                jax.ShapeDtypeStruct((C_pad, 1, W), jnp.float32),
                jax.ShapeDtypeStruct((C_pad, 1, W), jnp.float32),
            ),
            compiler_params=cparams,
        )(inv_sf, x_v, rm3, rv3, g3, b3)
        new_rm = nrm3[:C].reshape(1, C, 1, W)
        new_rv = nrv3[:C].reshape(1, C, 1, W)
    else:
        # Param-only precompute (tiny), lane-tiled to match the packed view.
        scale = gamma / jnp.sqrt(running_vars + EPS)      # (1, C, 1, W)
        shift = beta - running_means * scale
        if k > 1:
            scale = jnp.concatenate([scale] * k, axis=-1)
            shift = jnp.concatenate([shift] * k, axis=-1)
        scale = scale.reshape(C, 1, kW).astype(jnp.float32)
        shift = shift.reshape(C, 1, kW).astype(jnp.float32)
        if C_pad != C:
            pad = ((0, C_pad - C), (0, 0), (0, 0))
            scale = jnp.pad(scale, pad)
            shift = jnp.pad(shift, pad)
        pspec_t = pl.BlockSpec((Cb, 1, kW), lambda c: (c, 0, 0))
        out_v = pl.pallas_call(
            _bn_eval_kernel,
            grid=grid,
            in_specs=[xspec, pspec_t, pspec_t],
            out_specs=xspec,
            out_shape=jax.ShapeDtypeStruct((N, C, Hk, kW), x.dtype),
            compiler_params=cparams,
        )(x_v, scale, shift)
        new_rm, new_rv = running_means, running_vars

    return out_v.reshape(N, C, H, W), new_rm, new_rv


def _reference(x, nframes, rm, rv, gamma, beta):
    # Pure-JAX replica of the PyTorch forward (training path) for validation.
    frames = jnp.asarray(nframes, jnp.float32)
    sf = jnp.sum(frames)
    mean = jnp.sum(jnp.sum(x, axis=2, keepdims=True), axis=0, keepdims=True) / sf
    var = jnp.sum(jnp.sum((x - mean) ** 2, axis=2, keepdims=True),
                  axis=0, keepdims=True) / sf
    rm_new = (1 - MOMENTUM) * rm + MOMENTUM * mean
    rv_new = (1 - MOMENTUM) * rv + MOMENTUM * var
    res = (x - rm_new) / jnp.sqrt(rv_new + EPS) * gamma + beta
    return res, rm_new, rv_new


if __name__ == "__main__":
    N, C, H, W = 2, 4, 16, 16
    key = jax.random.PRNGKey(0)
    x = jax.random.normal(key, (N, C, H, W), dtype=jnp.float32)
    nframes = [16, 12]  # per-sample frame counts (sum used as the divisor)

    # Parameter init exactly as the module's __init__:
    running_means = jnp.zeros((1, C, 1, W), dtype=jnp.float32)
    running_vars = jnp.ones((1, C, 1, W), dtype=jnp.float32)
    gamma = jnp.ones((1, C, 1, W), dtype=jnp.float32)
    beta = jnp.zeros((1, C, 1, W), dtype=jnp.float32)

    out, new_rm, new_rv = voice_batch_norm_2d(
        x, nframes, running_means, running_vars, gamma, beta, training=True)
    jax.block_until_ready((out, new_rm, new_rv))

    ref_out, ref_rm, ref_rv = _reference(
        x, nframes, running_means, running_vars, gamma, beta)
    assert out.shape == (N, C, H, W)
    assert jnp.allclose(out, ref_out, rtol=1e-5, atol=1e-5)
    assert jnp.allclose(new_rm, ref_rm, rtol=1e-5, atol=1e-6)
    assert jnp.allclose(new_rv, ref_rv, rtol=1e-5, atol=1e-5)

    # Also exercise the eval (non-training) path once.
    out_eval, _, _ = voice_batch_norm_2d(
        x, nframes, new_rm, new_rv, gamma, beta, training=False)
    jax.block_until_ready(out_eval)
    ref_eval = (x - new_rm) / jnp.sqrt(new_rv + EPS) * gamma + beta
    assert jnp.allclose(out_eval, ref_eval, rtol=1e-5, atol=1e-5)

    print("KERNEL_OK")
</pallas_src>

<mosaic_0001>
module attributes {stable_mosaic.version = 11 : i64} {
  func.func @_bn_train_kernel(%arg0: i32, %arg1: memref<1xf32, #tpu.memory_space<smem>>, %arg2: memref<2x2x2x128xf32, #tpu.memory_space<vmem>>, %arg3: memref<2x1x16xf32, #tpu.memory_space<vmem>>, %arg4: memref<2x1x16xf32, #tpu.memory_space<vmem>>, %arg5: memref<2x1x16xf32, #tpu.memory_space<vmem>>, %arg6: memref<2x1x16xf32, #tpu.memory_space<vmem>>, %arg7: memref<2x2x2x128xf32, #tpu.memory_space<vmem>>, %arg8: memref<2x1x16xf32, #tpu.memory_space<vmem>>, %arg9: memref<2x1x16xf32, #tpu.memory_space<vmem>>) attributes {dimension_semantics = [#tpu.dimension_semantics<parallel>], iteration_bounds = array<i64: 2>, scalar_prefetch = 0 : i64, scratch_operands = 0 : i64, tpu.core_type = #tpu.core_type<tc>, window_params = [{transform_indices = @transform_0, window_bounds = array<i64: 1>}, {transform_indices = @transform_1, window_bounds = array<i64: 2, 2, 2, 128>}, {transform_indices = @transform_2, window_bounds = array<i64: 2, 1, 16>}, {transform_indices = @transform_3, window_bounds = array<i64: 2, 1, 16>}, {transform_indices = @transform_4, window_bounds = array<i64: 2, 1, 16>}, {transform_indices = @transform_5, window_bounds = array<i64: 2, 1, 16>}, {transform_indices = @transform_6, window_bounds = array<i64: 2, 2, 2, 128>}, {transform_indices = @transform_7, window_bounds = array<i64: 2, 1, 16>}, {transform_indices = @transform_8, window_bounds = array<i64: 2, 1, 16>}]} {
    %c0 = arith.constant 0 : index
    %0 = memref.load %arg1[%c0] : memref<1xf32, #tpu.memory_space<smem>>
    %c0_0 = arith.constant 0 : index
    %c0_1 = arith.constant 0 : index
    %c0_2 = arith.constant 0 : index
    %c0_3 = arith.constant 0 : index
    %1 = vector.load %arg2[%c0_0, %c0_1, %c0_2, %c0_3] : memref<2x2x2x128xf32, #tpu.memory_space<vmem>>, vector<2x2x2x128xf32>
    %cst = arith.constant dense<0.000000e+00> : vector<2x2x128xf32>
    %2 = vector.multi_reduction <add>, %1, %cst [0] : vector<2x2x2x128xf32> to vector<2x2x128xf32>
    %cst_4 = arith.constant dense<0.000000e+00> : vector<2x128xf32>
    %3 = vector.multi_reduction <add>, %2, %cst_4 [1] : vector<2x2x128xf32> to vector<2x128xf32>
    %4 = vector.shape_cast %3 : vector<2x128xf32> to vector<2x1x128xf32>
    %5 = arith.mulf %1, %1 : vector<2x2x2x128xf32>
    %cst_5 = arith.constant dense<0.000000e+00> : vector<2x2x128xf32>
    %6 = vector.multi_reduction <add>, %5, %cst_5 [0] : vector<2x2x2x128xf32> to vector<2x2x128xf32>
    %cst_6 = arith.constant dense<0.000000e+00> : vector<2x128xf32>
    %7 = vector.multi_reduction <add>, %6, %cst_6 [1] : vector<2x2x128xf32> to vector<2x128xf32>
    %8 = vector.shape_cast %7 : vector<2x128xf32> to vector<2x1x128xf32>
    %9 = vector.extract_strided_slice %4 {offsets = [0, 0, 0], sizes = [2, 1, 16], strides = [1, 1, 1]} : vector<2x1x128xf32> to vector<2x1x16xf32>
    %10 = vector.extract_strided_slice %4 {offsets = [0, 0, 16], sizes = [2, 1, 16], strides = [1, 1, 1]} : vector<2x1x128xf32> to vector<2x1x16xf32>
    %11 = arith.addf %9, %10 : vector<2x1x16xf32>
    %12 = vector.extract_strided_slice %4 {offsets = [0, 0, 32], sizes = [2, 1, 16], strides = [1, 1, 1]} : vector<2x1x128xf32> to vector<2x1x16xf32>
    %13 = arith.addf %11, %12 : vector<2x1x16xf32>
    %14 = vector.extract_strided_slice %4 {offsets = [0, 0, 48], sizes = [2, 1, 16], strides = [1, 1, 1]} : vector<2x1x128xf32> to vector<2x1x16xf32>
    %15 = arith.addf %13, %14 : vector<2x1x16xf32>
    %16 = vector.extract_strided_slice %4 {offsets = [0, 0, 64], sizes = [2, 1, 16], strides = [1, 1, 1]} : vector<2x1x128xf32> to vector<2x1x16xf32>
    %17 = arith.addf %15, %16 : vector<2x1x16xf32>
    %18 = vector.extract_strided_slice %4 {offsets = [0, 0, 80], sizes = [2, 1, 16], strides = [1, 1, 1]} : vector<2x1x128xf32> to vector<2x1x16xf32>
    %19 = arith.addf %17, %18 : vector<2x1x16xf32>
    %20 = vector.extract_strided_slice %4 {offsets = [0, 0, 96], sizes = [2, 1, 16], strides = [1, 1, 1]} : vector<2x1x128xf32> to vector<2x1x16xf32>
    %21 = arith.addf %19, %20 : vector<2x1x16xf32>
    %22 = vector.extract_strided_slice %4 {offsets = [0, 0, 112], sizes = [2, 1, 16], strides = [1, 1, 1]} : vector<2x1x128xf32> to vector<2x1x16xf32>
    %23 = arith.addf %21, %22 : vector<2x1x16xf32>
    %24 = vector.broadcast %0 : f32 to vector<2x1x16xf32>
    %25 = arith.mulf %23, %24 : vector<2x1x16xf32>
    %26 = vector.extract_strided_slice %8 {offsets = [0, 0, 0], sizes = [2, 1, 16], strides = [1, 1, 1]} : vector<2x1x128xf32> to vector<2x1x16xf32>
    %27 = vector.extract_strided_slice %8 {offsets = [0, 0, 16], sizes = [2, 1, 16], strides = [1, 1, 1]} : vector<2x1x128xf32> to vector<2x1x16xf32>
    %28 = arith.addf %26, %27 : vector<2x1x16xf32>
    %29 = vector.extract_strided_slice %8 {offsets = [0, 0, 32], sizes = [2, 1, 16], strides = [1, 1, 1]} : vector<2x1x128xf32> to vector<2x1x16xf32>
    %30 = arith.addf %28, %29 : vector<2x1x16xf32>
    %31 = vector.extract_strided_slice %8 {offsets = [0, 0, 48], sizes = [2, 1, 16], strides = [1, 1, 1]} : vector<2x1x128xf32> to vector<2x1x16xf32>
    %32 = arith.addf %30, %31 : vector<2x1x16xf32>
    %33 = vector.extract_strided_slice %8 {offsets = [0, 0, 64], sizes = [2, 1, 16], strides = [1, 1, 1]} : vector<2x1x128xf32> to vector<2x1x16xf32>
    %34 = arith.addf %32, %33 : vector<2x1x16xf32>
    %35 = vector.extract_strided_slice %8 {offsets = [0, 0, 80], sizes = [2, 1, 16], strides = [1, 1, 1]} : vector<2x1x128xf32> to vector<2x1x16xf32>
    %36 = arith.addf %34, %35 : vector<2x1x16xf32>
    %37 = vector.extract_strided_slice %8 {offsets = [0, 0, 96], sizes = [2, 1, 16], strides = [1, 1, 1]} : vector<2x1x128xf32> to vector<2x1x16xf32>
    %38 = arith.addf %36, %37 : vector<2x1x16xf32>
    %39 = vector.extract_strided_slice %8 {offsets = [0, 0, 112], sizes = [2, 1, 16], strides = [1, 1, 1]} : vector<2x1x128xf32> to vector<2x1x16xf32>
    %40 = arith.addf %38, %39 : vector<2x1x16xf32>
    %41 = vector.broadcast %0 : f32 to vector<2x1x16xf32>
    %42 = arith.mulf %40, %41 : vector<2x1x16xf32>
    %43 = arith.mulf %25, %25 : vector<2x1x16xf32>
    %cst_7 = arith.constant 3.200000e+01 : f32
    %44 = arith.mulf %cst_7, %0 : f32
    %cst_8 = arith.constant 2.000000e+00 : f32
    %45 = arith.subf %44, %cst_8 : f32
    %46 = vector.broadcast %45 : f32 to vector<2x1x16xf32>
    %47 = arith.mulf %43, %46 : vector<2x1x16xf32>
    %48 = arith.addf %42, %47 : vector<2x1x16xf32>
    %c0_9 = arith.constant 0 : index
    %c0_10 = arith.constant 0 : index
    %c0_11 = arith.constant 0 : index
    %49 = vector.load %arg3[%c0_9, %c0_10, %c0_11] : memref<2x1x16xf32, #tpu.memory_space<vmem>>, vector<2x1x16xf32>
    %cst_12 = arith.constant 0.899999976 : f32
    %50 = vector.broadcast %cst_12 : f32 to vector<2x1x16xf32>
    %51 = arith.mulf %50, %49 : vector<2x1x16xf32>
    %cst_13 = arith.constant 1.000000e-01 : f32
    %52 = vector.broadcast %cst_13 : f32 to vector<2x1x16xf32>
    %53 = arith.mulf %52, %25 : vector<2x1x16xf32>
    %54 = arith.addf %51, %53 : vector<2x1x16xf32>
    %c0_14 = arith.constant 0 : index
    %c0_15 = arith.constant 0 : index
    %c0_16 = arith.constant 0 : index
    %55 = vector.load %arg4[%c0_14, %c0_15, %c0_16] : memref<2x1x16xf32, #tpu.memory_space<vmem>>, vector<2x1x16xf32>
    %cst_17 = arith.constant 0.899999976 : f32
    %56 = vector.broadcast %cst_17 : f32 to vector<2x1x16xf32>
    %57 = arith.mulf %56, %55 : vector<2x1x16xf32>
    %cst_18 = arith.constant 1.000000e-01 : f32
    %58 = vector.broadcast %cst_18 : f32 to vector<2x1x16xf32>
    %59 = arith.mulf %58, %48 : vector<2x1x16xf32>
    %60 = arith.addf %57, %59 : vector<2x1x16xf32>
    %c0_19 = arith.constant 0 : index
    %c0_20 = arith.constant 0 : index
    %c0_21 = arith.constant 0 : index
    %61 = vector.load %arg8[%c0_19, %c0_20, %c0_21] : memref<2x1x16xf32, #tpu.memory_space<vmem>>, vector<2x1x16xf32>
    tpu.vector_store %arg8[%c0_19, %c0_20, %c0_21], %54 {strides = array<i32>} : memref<2x1x16xf32, #tpu.memory_space<vmem>>, vector<2x1x16xf32>,
    %c0_22 = arith.constant 0 : index
    %c0_23 = arith.constant 0 : index
    %c0_24 = arith.constant 0 : index
    %62 = vector.load %arg9[%c0_22, %c0_23, %c0_24] : memref<2x1x16xf32, #tpu.memory_space<vmem>>, vector<2x1x16xf32>
    tpu.vector_store %arg9[%c0_22, %c0_23, %c0_24], %60 {strides = array<i32>} : memref<2x1x16xf32, #tpu.memory_space<vmem>>, vector<2x1x16xf32>,
    %c0_25 = arith.constant 0 : index
    %c0_26 = arith.constant 0 : index
    %c0_27 = arith.constant 0 : index
    %63 = vector.load %arg5[%c0_25, %c0_26, %c0_27] : memref<2x1x16xf32, #tpu.memory_space<vmem>>, vector<2x1x16xf32>
    %cst_28 = arith.constant 9.99999974E-6 : f32
    %64 = vector.broadcast %cst_28 : f32 to vector<2x1x16xf32>
    %65 = arith.addf %60, %64 : vector<2x1x16xf32>
    %66 = math.rsqrt %65 : vector<2x1x16xf32>
    %67 = arith.mulf %63, %66 : vector<2x1x16xf32>
    %c0_29 = arith.constant 0 : index
    %c0_30 = arith.constant 0 : index
    %c0_31 = arith.constant 0 : index
    %68 = vector.load %arg6[%c0_29, %c0_30, %c0_31] : memref<2x1x16xf32, #tpu.memory_space<vmem>>, vector<2x1x16xf32>
    %69 = arith.mulf %54, %67 : vector<2x1x16xf32>
    %70 = arith.subf %68, %69 : vector<2x1x16xf32>
    %71 = tpu.concatenate %67, %67, %67, %67, %67, %67, %67, %67 in 2 : vector<2x1x16xf32>, vector<2x1x16xf32>, vector<2x1x16xf32>, vector<2x1x16xf32>, vector<2x1x16xf32>, vector<2x1x16xf32>, vector<2x1x16xf32>, vector<2x1x16xf32> -> vector<2x1x128xf32>
    %72 = vector.shape_cast %71 : vector<2x1x128xf32> to vector<1x2x1x128xf32>
    %73 = vector.broadcast %72 : vector<1x2x1x128xf32> to vector<2x2x2x128xf32>
    %74 = arith.mulf %1, %73 : vector<2x2x2x128xf32>
    %75 = tpu.concatenate %70, %70, %70, %70, %70, %70, %70, %70 in 2 : vector<2x1x16xf32>, vector<2x1x16xf32>, vector<2x1x16xf32>, vector<2x1x16xf32>, vector<2x1x16xf32>, vector<2x1x16xf32>, vector<2x1x16xf32>, vector<2x1x16xf32> -> vector<2x1x128xf32>
    %76 = vector.shape_cast %75 : vector<2x1x128xf32> to vector<1x2x1x128xf32>
    %77 = vector.broadcast %76 : vector<1x2x1x128xf32> to vector<2x2x2x128xf32>
    %78 = arith.addf %74, %77 : vector<2x2x2x128xf32>
    %c0_32 = arith.constant 0 : index
    %c0_33 = arith.constant 0 : index
    %c0_34 = arith.constant 0 : index
    %c0_35 = arith.constant 0 : index
    %79 = vector.load %arg7[%c0_32, %c0_33, %c0_34, %c0_35] : memref<2x2x2x128xf32, #tpu.memory_space<vmem>>, vector<2x2x2x128xf32>
    tpu.vector_store %arg7[%c0_32, %c0_33, %c0_34, %c0_35], %78 {strides = array<i32>} : memref<2x2x2x128xf32, #tpu.memory_space<vmem>>, vector<2x2x2x128xf32>,
    return
  }
  func.func @transform_0(%arg0: i32) -> i32 {
    %c0_i32 = arith.constant 0 : i32
    %c0_i32_0 = arith.constant 0 : i32
    return %c0_i32 : i32
  }
  func.func @transform_1(%arg0: i32) -> (i32, i32, i32, i32) {
    %c0_i32 = arith.constant 0 : i32
    %c0_i32_0 = arith.constant 0 : i32
    %c0_i32_1 = arith.constant 0 : i32
    %c0_i32_2 = arith.constant 0 : i32
    return %c0_i32, %arg0, %c0_i32_0, %c0_i32_1 : i32, i32, i32, i32
  }
  func.func @transform_2(%arg0: i32) -> (i32, i32, i32) {
    %c0_i32 = arith.constant 0 : i32
    %c0_i32_0 = arith.constant 0 : i32
    %c0_i32_1 = arith.constant 0 : i32
    return %arg0, %c0_i32, %c0_i32_0 : i32, i32, i32
  }
  func.func @transform_3(%arg0: i32) -> (i32, i32, i32) {
    %c0_i32 = arith.constant 0 : i32
    %c0_i32_0 = arith.constant 0 : i32
    %c0_i32_1 = arith.constant 0 : i32
    return %arg0, %c0_i32, %c0_i32_0 : i32, i32, i32
  }
  func.func @transform_4(%arg0: i32) -> (i32, i32, i32) {
    %c0_i32 = arith.constant 0 : i32
    %c0_i32_0 = arith.constant 0 : i32
    %c0_i32_1 = arith.constant 0 : i32
    return %arg0, %c0_i32, %c0_i32_0 : i32, i32, i32
  }
  func.func @transform_5(%arg0: i32) -> (i32, i32, i32) {
    %c0_i32 = arith.constant 0 : i32
    %c0_i32_0 = arith.constant 0 : i32
    %c0_i32_1 = arith.constant 0 : i32
    return %arg0, %c0_i32, %c0_i32_0 : i32, i32, i32
  }
  func.func @transform_6(%arg0: i32) -> (i32, i32, i32, i32) {
    %c0_i32 = arith.constant 0 : i32
    %c0_i32_0 = arith.constant 0 : i32
    %c0_i32_1 = arith.constant 0 : i32
    %c0_i32_2 = arith.constant 0 : i32
    return %c0_i32, %arg0, %c0_i32_0, %c0_i32_1 : i32, i32, i32, i32
  }
  func.func @transform_7(%arg0: i32) -> (i32, i32, i32) {
    %c0_i32 = arith.constant 0 : i32
    %c0_i32_0 = arith.constant 0 : i32
    %c0_i32_1 = arith.constant 0 : i32
    return %arg0, %c0_i32, %c0_i32_0 : i32, i32, i32
  }
  func.func @transform_8(%arg0: i32) -> (i32, i32, i32) {
    %c0_i32 = arith.constant 0 : i32
    %c0_i32_0 = arith.constant 0 : i32
    %c0_i32_1 = arith.constant 0 : i32
    return %arg0, %c0_i32, %c0_i32_0 : i32, i32, i32
  }
}

</mosaic_0001>

<llo_original>
// kernel: tpu_custom_call.1
$region0: #{tpu_custom_call.1}
  #allocation0 [shape = 'u32[]', space=smem, size = 0x4, offset = 0x4, fixed_abs, tag = 'smem constant byte address 0x4 - core index']
  #allocation1 [shape = 'u32[144,128]{1,0:T(1,128)}', space=vmem, size = 0x12000, scoped, tag = 'internal scratch']
  #allocation2 [shape = 'f32[1]{0:T(128)S(6)}', space=smem, size = 0x200, scoped, tag = 'scoped memory for tpu_custom_call.1']
  #allocation10 [shape = 's32[]', space=sflag, size = 0x4, offset = 0, fixed_abs, tag = 'sflag constant byte address 0x0 - dummy sync flag']
  #allocation12 [shape = 's32[]', space=sflag, size = 0x4, offset = 0, fixed_abs, tag = 'sflag constant byte address 0x0 - dummy sync flag']
  %s0 = inlined_call_operand.<no memory space> [shape: f32[1], index: 0, kind: input, shape index: {}]
  %s1 = inlined_call_operand.hbm [shape: f32[2,4,2,128], index: 1, kind: input, shape index: {}]
  %s2 = inlined_call_operand.vmem [shape: f32[4,1,16], index: 2, kind: input, shape index: {}]
  %s3 = inlined_call_operand.vmem [shape: f32[4,1,16], index: 3, kind: input, shape index: {}]
  %s4 = inlined_call_operand.vmem [shape: f32[4,1,16], index: 4, kind: input, shape index: {}]
  %s5 = inlined_call_operand.vmem [shape: f32[4,1,16], index: 5, kind: input, shape index: {}]
  %s6 = inlined_call_operand.hbm [shape: f32[2,4,2,128], index: 6, kind: output, shape index: {0}]
  %s7 = inlined_call_operand.hbm [shape: f32[4,1,16], index: 7, kind: output, shape index: {1}]
  %s8 = inlined_call_operand.hbm [shape: f32[4,1,16], index: 8, kind: output, shape index: {2}]
  %9 = xla_tuple %s6, %s7, %s8
  %s10 = sld [smem:[#allocation0]]
  $region77: #{tpu_custom_call.1} parent=0
    _
  %s12 = ssub.s32 1, %s10
  %s13 = scalar_select 0, %s12, %s10
  %14 = sst [smem:[#allocation2]] %s0
  $region1: #{tpu_custom_call.1} parent=0
    #allocation3 [shape = 'u8[8192]{0}', space=vmem, size = 0x2000, scoped, tag = 'input window, operand 1']
    #allocation4 [shape = 's32[2]{0}', space=sflag, size = 0x8, scoped, tag = 'scoped memory for tpu_custom_call.1']
    #allocation5 [shape = 's32[2]{0}', space=sflag, size = 0x8, scoped, tag = 'scoped memory for tpu_custom_call.1']
    #allocation6 [shape = 'u8[8192]{0}', space=vmem, size = 0x2000, scoped, tag = 'output window, operand 0']
    #allocation7 [shape = 'u8[2048]{0}', space=vmem, size = 0x800, scoped, tag = 'output window, operand 1']
    #allocation8 [shape = 's32[2]{0}', space=sflag, size = 0x8, scoped, tag = 'scoped memory for tpu_custom_call.1']
    #allocation9 [shape = 'u8[2048]{0}', space=vmem, size = 0x800, scoped, tag = 'output window, operand 2']
    %15 = vsyncpa [#allocation4], 0
    %s16 = scalar_lea.sflag [#allocation4], 1
    %17 = vsyncpa %s16, 0
    %18 = vsyncpa [#allocation5], 0
    %s19 = scalar_lea.sflag [#allocation5], 1
    %20 = vsyncpa %s19, 0
    %21 = vsyncpa [#allocation8], 0
    %s22 = scalar_lea.sflag [#allocation8], 1
    %23 = vsyncpa %s22, 0
    loop: start=0, step=1, limit=4
    $region2: #{tpu_custom_call.1} parent=1 // loop_pre_header
      _
    $region3: #{tpu_custom_call.1} parent=1 // loop_header
      %s25 = sphi 0, %s29
      %p26 = scmp.ge.s32.totalorder %s25, 4
      %s33 = sphi 0, %s33
      %s35 = sphi 0, %s33
      %s36 = sphi 0, %s35
      %s50 = sphi 0, %s36
      %s56 = sphi 0, %s58
      %s59 = sphi 0, %s56
      %s60 = sphi 0, %s59
      %s76 = sphi 0, %s60
      %s82 = sphi 0, %s84
      %s85 = sphi 0, %s82
      %s86 = sphi 0, %s85
      %s102 = sphi 0, %s86
      %s108 = sphi 0, %s110
      %s111 = sphi 0, %s108
      %s112 = sphi 0, %s111
      %s128 = sphi 0, %s112
      %s134 = sphi 0, %s136
      %s137 = sphi 0, %s134
      %s138 = sphi 0, %s137
      %s154 = sphi 0, %s138
      %s160 = sphi 0, %s162
      %s163 = sphi 0, %s160
      %s164 = sphi 0, %s163
      %s180 = sphi 0, %s164
      %s186 = sphi 0, %s188
      %s189 = sphi 0, %s186
      %s190 = sphi 0, %s189
      %s206 = sphi 0, %s190
      %s212 = sphi 0, %s214
      %s215 = sphi 0, %s212
      %s216 = sphi 0, %s215
      %s232 = sphi 0, %s216
      %s238 = sphi 0, %s240
      %s241 = sphi 0, %s238
      %s242 = sphi 0, %s241
      %s258 = sphi 0, %s242
    $region4: #{tpu_custom_call.1} parent=1 // loop_header_branch
      %28 = sbr.rel (%p26) target = $region8
    $region5: #{tpu_custom_call.1} parent=1 // loop_body
      %s30 = ssub.s32 %s25, 1
      %s31 = ssub.s32 %s25, 2
      %s32 = sadd.s32 %s25, 1
      %s34 = sadd.s32 %s33, 1
      %p37 = scmp.eq.s32.totalorder %s25, 1
      %p38 = scmp.ne.s32.totalorder %s33, %s35
      %p39 = scmp.eq.s32.totalorder %s25, 0
      %p40 = por %p38, %p39
      %p41 = scmp.ne.s32.totalorder %s33, %s35
      %p42 = scmp.eq.s32.totalorder %s30, 1
      %p43 = por %p41, %p42
      %p44 = scmp.ne.s32.totalorder %s35, %s36
      %p45 = scmp.eq.s32.totalorder %s30, 0
      %p46 = por %p44, %p45
      %p47 = scmp.ne.s32.totalorder %s35, %s36
      %p48 = scmp.eq.s32.totalorder %s31, 1
      %p49 = por %p47, %p48
      %p51 = scmp.ne.s32.totalorder %s36, %s50
      %p52 = scmp.eq.s32.totalorder %s31, 0
      %p53 = por %p51, %p52
      %s54 = ssub.s32 %s25, %s32
      %p55 = scmp.eq.s32.totalorder %s54, 0
      %s57 = sadd.s32 %s56, 1
      %s58 = scalar_select %p55, %s56, %s57
      %p61 = pneg %p55
      %p62 = scmp.eq.s32.totalorder %s25, 1
      %p63 = por %p61, %p62
      %p64 = scmp.ne.s32.totalorder %s56, %s59
      %p65 = scmp.eq.s32.totalorder %s25, 0
      %p66 = por %p64, %p65
      %p67 = scmp.ne.s32.totalorder %s56, %s59
      %p68 = scmp.eq.s32.totalorder %s30, 1
      %p69 = por %p67, %p68
      %p70 = scmp.ne.s32.totalorder %s59, %s60
      %p71 = scmp.eq.s32.totalorder %s30, 0
      %p72 = por %p70, %p71
      %p73 = scmp.ne.s32.totalorder %s59, %s60
      %p74 = scmp.eq.s32.totalorder %s31, 1
      %p75 = por %p73, %p74
      %p77 = scmp.ne.s32.totalorder %s60, %s76
      %p78 = scmp.eq.s32.totalorder %s31, 0
      %p79 = por %p77, %p78
      %s80 = ssub.s32 %s25, %s32
      %p81 = scmp.eq.s32.totalorder %s80, 0
      %s83 = sadd.s32 %s82, 1
      %s84 = scalar_select %p81, %s82, %s83
      %p87 = pneg %p81
      %p88 = scmp.eq.s32.totalorder %s25, 1
      %p89 = por %p87, %p88
      %p90 = scmp.ne.s32.totalorder %s82, %s85
      %p91 = scmp.eq.s32.totalorder %s25, 0
      %p92 = por %p90, %p91
      %p93 = scmp.ne.s32.totalorder %s82, %s85
      %p94 = scmp.eq.s32.totalorder %s30, 1
      %p95 = por %p93, %p94
      %p96 = scmp.ne.s32.totalorder %s85, %s86
      %p97 = scmp.eq.s32.totalorder %s30, 0
      %p98 = por %p96, %p97
      %p99 = scmp.ne.s32.totalorder %s85, %s86
      %p100 = scmp.eq.s32.totalorder %s31, 1
      %p101 = por %p99, %p100
      %p103 = scmp.ne.s32.totalorder %s86, %s102
      %p104 = scmp.eq.s32.totalorder %s31, 0
      %p105 = por %p103, %p104
      %s106 = ssub.s32 %s25, %s32
      %p107 = scmp.eq.s32.totalorder %s106, 0
      %s109 = sadd.s32 %s108, 1
      %s110 = scalar_select %p107, %s108, %s109
      %p113 = pneg %p107
      %p114 = scmp.eq.s32.totalorder %s25, 1
      %p115 = por %p113, %p114
      %p116 = scmp.ne.s32.totalorder %s108, %s111
      %p117 = scmp.eq.s32.totalorder %s25, 0
      %p118 = por %p116, %p117
      %p119 = scmp.ne.s32.totalorder %s108, %s111
      %p120 = scmp.eq.s32.totalorder %s30, 1
      %p121 = por %p119, %p120
      %p122 = scmp.ne.s32.totalorder %s111, %s112
      %p123 = scmp.eq.s32.totalorder %s30, 0
      %p124 = por %p122, %p123
      %p125 = scmp.ne.s32.totalorder %s111, %s112
      %p126 = scmp.eq.s32.totalorder %s31, 1
      %p127 = por %p125, %p126
      %p129 = scmp.ne.s32.totalorder %s112, %s128
      %p130 = scmp.eq.s32.totalorder %s31, 0
      %p131 = por %p129, %p130
      %s132 = ssub.s32 %s25, %s32
      %p133 = scmp.eq.s32.totalorder %s132, 0
      %s135 = sadd.s32 %s134, 1
      %s136 = scalar_select %p133, %s134, %s135
      %p139 = pneg %p133
      %p140 = scmp.eq.s32.totalorder %s25, 1
      %p141 = por %p139, %p140
      %p142 = scmp.ne.s32.totalorder %s134, %s137
      %p143 = scmp.eq.s32.totalorder %s25, 0
      %p144 = por %p142, %p143
      %p145 = scmp.ne.s32.totalorder %s134, %s137
      %p146 = scmp.eq.s32.totalorder %s30, 1
      %p147 = por %p145, %p146
      %p148 = scmp.ne.s32.totalorder %s137, %s138
      %p149 = scmp.eq.s32.totalorder %s30, 0
      %p150 = por %p148, %p149
      %p151 = scmp.ne.s32.totalorder %s137, %s138
      %p152 = scmp.eq.s32.totalorder %s31, 1
      %p153 = por %p151, %p152
      %p155 = scmp.ne.s32.totalorder %s138, %s154
      %p156 = scmp.eq.s32.totalorder %s31, 0
      %p157 = por %p155, %p156
      %s158 = ssub.s32 %s25, %s32
      %p159 = scmp.eq.s32.totalorder %s158, 0
      %s161 = sadd.s32 %s160, 1
      %s162 = scalar_select %p159, %s160, %s161
      %p165 = pneg %p159
      %p166 = scmp.eq.s32.totalorder %s25, 1
      %p167 = por %p165, %p166
      %p168 = scmp.ne.s32.totalorder %s160, %s163
      %p169 = scmp.eq.s32.totalorder %s25, 0
      %p170 = por %p168, %p169
      %p171 = scmp.ne.s32.totalorder %s160, %s163
      %p172 = scmp.eq.s32.totalorder %s30, 1
      %p173 = por %p171, %p172
      %p174 = scmp.ne.s32.totalorder %s163, %s164
      %p175 = scmp.eq.s32.totalorder %s30, 0
      %p176 = por %p174, %p175
      %p177 = scmp.ne.s32.totalorder %s163, %s164
      %p178 = scmp.eq.s32.totalorder %s31, 1
      %p179 = por %p177, %p178
      %p181 = scmp.ne.s32.totalorder %s164, %s180
      %p182 = scmp.eq.s32.totalorder %s31, 0
      %p183 = por %p181, %p182
      %s184 = ssub.s32 %s25, %s32
      %p185 = scmp.eq.s32.totalorder %s184, 0
      %s187 = sadd.s32 %s186, 1
      %s188 = scalar_select %p185, %s186, %s187
      %p191 = pneg %p185
      %p192 = scmp.eq.s32.totalorder %s25, 1
      %p193 = por %p191, %p192
      %p194 = scmp.ne.s32.totalorder %s186, %s189
      %p195 = scmp.eq.s32.totalorder %s25, 0
      %p196 = por %p194, %p195
      %p197 = scmp.ne.s32.totalorder %s186, %s189
      %p198 = scmp.eq.s32.totalorder %s30, 1
      %p199 = por %p197, %p198
      %p200 = scmp.ne.s32.totalorder %s189, %s190
      %p201 = scmp.eq.s32.totalorder %s30, 0
      %p202 = por %p200, %p201
      %p203 = scmp.ne.s32.totalorder %s189, %s190
      %p204 = scmp.eq.s32.totalorder %s31, 1
      %p205 = por %p203, %p204
      %p207 = scmp.ne.s32.totalorder %s190, %s206
      %p208 = scmp.eq.s32.totalorder %s31, 0
      %p209 = por %p207, %p208
      %s210 = ssub.s32 %s25, %s32
      %p211 = scmp.eq.s32.totalorder %s210, 0
      %s213 = sadd.s32 %s212, 1
      %s214 = scalar_select %p211, %s212, %s213
      %p217 = pneg %p211
      %p218 = scmp.eq.s32.totalorder %s25, 1
      %p219 = por %p217, %p218
      %p220 = scmp.ne.s32.totalorder %s212, %s215
      %p221 = scmp.eq.s32.totalorder %s25, 0
      %p222 = por %p220, %p221
      %p223 = scmp.ne.s32.totalorder %s212, %s215
      %p224 = scmp.eq.s32.totalorder %s30, 1
      %p225 = por %p223, %p224
      %p226 = scmp.ne.s32.totalorder %s215, %s216
      %p227 = scmp.eq.s32.totalorder %s30, 0
      %p228 = por %p226, %p227
      %p229 = scmp.ne.s32.totalorder %s215, %s216
      %p230 = scmp.eq.s32.totalorder %s31, 1
      %p231 = por %p229, %p230
      %p233 = scmp.ne.s32.totalorder %s216, %s232
      %p234 = scmp.eq.s32.totalorder %s31, 0
      %p235 = por %p233, %p234
      %s236 = ssub.s32 %s25, %s32
      %p237 = scmp.eq.s32.totalorder %s236, 0
      %s239 = sadd.s32 %s238, 1
      %s240 = scalar_select %p237, %s238, %s239
      %p243 = pneg %p237
      %p244 = scmp.eq.s32.totalorder %s25, 1
      %p245 = por %p243, %p244
      %p246 = scmp.ne.s32.totalorder %s238, %s241
      %p247 = scmp.eq.s32.totalorder %s25, 0
      %p248 = por %p246, %p247
      %p249 = scmp.ne.s32.totalorder %s238, %s241
      %p250 = scmp.eq.s32.totalorder %s30, 1
      %p251 = por %p249, %p250
      %p252 = scmp.ne.s32.totalorder %s241, %s242
      %p253 = scmp.eq.s32.totalorder %s30, 0
      %p254 = por %p252, %p253
      %p255 = scmp.ne.s32.totalorder %s241, %s242
      %p256 = scmp.eq.s32.totalorder %s31, 1
      %p257 = por %p255, %p256
      %p259 = scmp.ne.s32.totalorder %s242, %s258
      %p260 = scmp.eq.s32.totalorder %s31, 0
      %p261 = por %p259, %p260
      %p262 = scmp.le.s32.totalorder 1, %s25
      %p263 = scmp.lt.s32.totalorder %s25, 3
      %p264 = pnand %p262, %p263
      %p265 = pneg %p264
      // Predicated region
      $region9: #{tpu_custom_call.1} parent=5 // pred_check
        _
      $region10: #{tpu_custom_call.1} parent=5 // pred_check_branch
        %267 = sbr.rel (%p264) target = $region12
      $region11: #{tpu_custom_call.1} parent=5 // pred_region
        %s268 = ssub.s32 %s25, 1
        // Predicated region
        $region13: #{tpu_custom_call.1} parent=11 // pred_check
          %p269 = pneg %p46
        $region14: #{tpu_custom_call.1} parent=11 // pred_check_branch
          %271 = sbr.rel (%p269) target = $region16
        $region15: #{tpu_custom_call.1} parent=11 // pred_region
          _
        $region16: #{tpu_custom_call.1} parent=11 // pred_fallthru
          _
      $region12: #{tpu_custom_call.1} parent=5 // pred_fallthru
        _
      %p272 = scmp.lt.s32.totalorder %s25, 2
      // Predicated region
      $region17: #{tpu_custom_call.1} parent=5 // pred_check
        %p273 = pneg %p272
      $region18: #{tpu_custom_call.1} parent=5 // pred_check_branch
        %275 = sbr.rel (%p273) target = $region20
      $region19: #{tpu_custom_call.1} parent=5 // pred_region
        // Predicated region
        $region21: #{tpu_custom_call.1} parent=19 // pred_check
          %p276 = pneg %p66
        $region22: #{tpu_custom_call.1} parent=19 // pred_check_branch
          %278 = sbr.rel (%p276) target = $region24
        $region23: #{tpu_custom_call.1} parent=19 // pred_region
          #allocation11 [shape = 'u32[6]{0}', space=smem, size = 0x18, scoped, tag = 'DMA stride descriptor']
          %s279 = sand.u32 %s56, 1
          %s280 = scalar_lea.sflag [#allocation4], %s279
          %s281 = sand.u32 %s56, 1
          %s282 = smul.addr %s281, 8
          %s283 = scalar_lea.vmem [#allocation3], %s282
          %s284 = smul.u32 2, %s25
          %s286 = ssub.s32 128, 128
          %287 = vsyncadd %s280, %s286
          %s288 = smul.addr %s284, 32
          %s289 = scalar_lea.hbm %s1, %s288
          %s291 = sshll.u32 1, 14
          %s292 = sxor.u32 4294967295, %s291
          %s294 = sld [smem:[#allocation0]]
          %s295 = sadd.s32 2, %s294
          %s297 = sshll.u32 7, 26
          %s298 = sxor.u32 4294967295, %s297
          %s299 = sand.u32 0, %s298
          %s300 = sshll.u32 %s295, 26
          %s301 = sor.u32 %s299, %s300
          %s302 = sshll.u32 %s283, 4
          %s303 = int_to_ptr.vmem [resolvable:$true] %s302
          %309 = sst [smem:[#allocation11]] 128
          %s310 = scalar_lea.smem [#allocation11], 1
          %311 = sst [smem:[%s310]] 64
          %s312 = scalar_lea.smem [#allocation11], 2
          %313 = sst [smem:[%s312]] 2
          %s314 = scalar_lea.smem [#allocation11], 3
          %315 = sst [smem:[%s314]] 32
          %s316 = scalar_lea.smem [#allocation11], 4
          %317 = sst [smem:[%s316]] 32
          %s318 = scalar_lea.smem [#allocation11], 5
          %319 = sst [smem:[%s318]] 2
          %321 = dma.general %s289, 128, %s303, %s280, [#allocation10], [#allocation11], %s301, 0
        $region24: #{tpu_custom_call.1} parent=19 // pred_fallthru
          _
        // Predicated region
        $region25: #{tpu_custom_call.1} parent=19 // pred_check
          %p322 = pneg %p92
        $region26: #{tpu_custom_call.1} parent=19 // pred_check_branch
          %324 = sbr.rel (%p322) target = $region28
        $region27: #{tpu_custom_call.1} parent=19 // pred_region
          %s325 = smul.u32 2, %s25
          %p326 = scmp.lt.s32.totalorder %s325, 3
          %s327 = scalar_select %p326, %s325, 3
          %s328 = scalar_lea.vmem %s2, %s327
          %s329 = smul.u32 2, %s25
        $region28: #{tpu_custom_call.1} parent=19 // pred_fallthru
          _
        // Predicated region
        $region29: #{tpu_custom_call.1} parent=19 // pred_check
          %p330 = pneg %p118
        $region30: #{tpu_custom_call.1} parent=19 // pred_check_branch
          %332 = sbr.rel (%p330) target = $region32
        $region31: #{tpu_custom_call.1} parent=19 // pred_region
          %s333 = smul.u32 2, %s25
          %p334 = scmp.lt.s32.totalorder %s333, 3
          %s335 = scalar_select %p334, %s333, 3
          %s336 = scalar_lea.vmem %s3, %s335
          %s337 = smul.u32 2, %s25
        $region32: #{tpu_custom_call.1} parent=19 // pred_fallthru
          _
        // Predicated region
        $region33: #{tpu_custom_call.1} parent=19 // pred_check
          %p338 = pneg %p144
        $region34: #{tpu_custom_call.1} parent=19 // pred_check_branch
          %340 = sbr.rel (%p338) target = $region36
        $region35: #{tpu_custom_call.1} parent=19 // pred_region
          %s341 = smul.u32 2, %s25
          %p342 = scmp.lt.s32.totalorder %s341, 3
          %s343 = scalar_select %p342, %s341, 3
          %s344 = scalar_lea.vmem %s4, %s343
          %s345 = smul.u32 2, %s25
        $region36: #{tpu_custom_call.1} parent=19 // pred_fallthru
          _
        // Predicated region
        $region37: #{tpu_custom_call.1} parent=19 // pred_check
          %p346 = pneg %p170
        $region38: #{tpu_custom_call.1} parent=19 // pred_check_branch
          %348 = sbr.rel (%p346) target = $region40
        $region39: #{tpu_custom_call.1} parent=19 // pred_region
          %s349 = smul.u32 2, %s25
          %p350 = scmp.lt.s32.totalorder %s349, 3
          %s351 = scalar_select %p350, %s349, 3
          %s352 = scalar_lea.vmem %s5, %s351
          %s353 = smul.u32 2, %s25
        $region40: #{tpu_custom_call.1} parent=19 // pred_fallthru
          _
      $region20: #{tpu_custom_call.1} parent=5 // pred_fallthru
        _
      %p354 = scmp.le.s32.totalorder 1, %s25
      %p355 = scmp.lt.s32.totalorder %s25, 3
      %p356 = pnand %p354, %p355
      %p357 = pneg %p356
      // Predicated region
      $region41: #{tpu_custom_call.1} parent=5 // pred_check
        _
      $region42: #{tpu_custom_call.1} parent=5 // pred_check_branch
        %359 = sbr.rel (%p356) target = $region44
      $region43: #{tpu_custom_call.1} parent=5 // pred_region
        %s360 = ssub.s32 %s25, 1
        %s361 = sand.u32 %s59, 1
        %s362 = scalar_lea.sflag [#allocation4], %s361
        %s363 = sand.u32 %s59, 1
        %s364 = smul.addr %s363, 8
        %s365 = scalar_lea.vmem [#allocation3], %s364
        // Predicated region
        $region45: #{tpu_custom_call.1} parent=43 // pred_check
          %p366 = pneg %p72
        $region46: #{tpu_custom_call.1} parent=43 // pred_check_branch
          %368 = sbr.rel (%p366) target = $region48
        $region47: #{tpu_custom_call.1} parent=43 // pred_region
          %369 = dma.done %s362, 128
        $region48: #{tpu_custom_call.1} parent=43 // pred_fallthru
          _
        %p370 = pneg %p46
        %p371 = pneg %p43
        %s372 = sand.u32 %s59, 1
        %s373 = scalar_lea.sflag [#allocation4], %s372
        %s374 = sand.u32 %s59, 1
        %s375 = smul.addr %s374, 8
        %s376 = scalar_lea.vmem [#allocation3], %s375
        %p377 = pneg %p72
        %p378 = pneg %p69
        %s379 = smul.u32 2, %s30
        %p380 = scmp.lt.s32.totalorder %s379, 3
        %s381 = scalar_select %p380, %s379, 3
        %s382 = scalar_lea.vmem %s2, %s381
        %p383 = pneg %p98
        %p384 = pneg %p95
        %s385 = smul.u32 2, %s30
        %p386 = scmp.lt.s32.totalorder %s385, 3
        %s387 = scalar_select %p386, %s385, 3
        %s388 = scalar_lea.vmem %s3, %s387
        %p389 = pneg %p124
        %p390 = pneg %p121
        %s391 = smul.u32 2, %s30
        %p392 = scmp.lt.s32.totalorder %s391, 3
        %s393 = scalar_select %p392, %s391, 3
        %s394 = scalar_lea.vmem %s4, %s393
        %p395 = pneg %p150
        %p396 = pneg %p147
        %s397 = smul.u32 2, %s30
        %p398 = scmp.lt.s32.totalorder %s397, 3
        %s399 = scalar_select %p398, %s397, 3
        %s400 = scalar_lea.vmem %s5, %s399
        %p401 = pneg %p176
        %p402 = pneg %p173
        %p403 = pneg %p202
        %p404 = pneg %p199
        %s405 = sand.u32 %s189, 1
        %s406 = scalar_lea.sflag [#allocation5], %s405
        %s407 = sand.u32 %s189, 1
        %s408 = smul.addr %s407, 8
        %s409 = scalar_lea.vmem [#allocation6], %s408
        %p410 = pneg %p228
        %p411 = pneg %p225
        %s412 = sand.u32 %s30, 1
        %s413 = scalar_lea.sflag [#allocation8], %s412
        %s414 = sand.u32 %s215, 1
        %s415 = smul.addr %s414, 2
        %s416 = scalar_lea.vmem [#allocation7], %s415
        %p417 = pneg %p254
        %p418 = pneg %p251
        %s419 = sand.u32 %s30, 1
        %s420 = scalar_lea.sflag [#allocation8], %s419
        %s421 = sand.u32 %s241, 1
        %s422 = smul.addr %s421, 2
        %s423 = scalar_lea.vmem [#allocation9], %s422
        %s424 = smul.u32 2, %s30
        %s425 = smul.u32 2, %s30
        %p426 = scmp.lt.s32.totalorder %s425, 3
        %s427 = scalar_select %p426, %s425, 3
        %s428 = scalar_lea.vmem %s2, %s427
        %s429 = smul.u32 2, %s30
        %s430 = smul.u32 2, %s30
        %p431 = scmp.lt.s32.totalorder %s430, 3
        %s432 = scalar_select %p431, %s430, 3
        %s433 = scalar_lea.vmem %s3, %s432
        %s434 = smul.u32 2, %s30
        %s435 = smul.u32 2, %s30
        %p436 = scmp.lt.s32.totalorder %s435, 3
        %s437 = scalar_select %p436, %s435, 3
        %s438 = scalar_lea.vmem %s4, %s437
        %s439 = smul.u32 2, %s30
        %s440 = smul.u32 2, %s30
        %p441 = scmp.lt.s32.totalorder %s440, 3
        %s442 = scalar_select %p441, %s440, 3
        %s443 = scalar_lea.vmem %s5, %s442
        %s444 = smul.u32 2, %s30
        %s445 = smul.u32 2, %s30
        %s446 = smul.u32 2, %s30
        %s447 = smul.u32 2, %s30
        %s448 = sld [smem:[#allocation2]]
        %v449 = vld [vmem:[%s365] sm:$0x3]
        %v450 = vld [vmem:[%s365 + $0x2] sm:$0x3]
        %v451 = vld [vmem:[%s365 + $0x4] sm:$0x3]
        %v452 = vld [vmem:[%s365 + $0x6] sm:$0x3]
        %vm453 = vcmask 1041408
        %v454 = vsel %vm453, %v449, 0.0
        %v455 = vsel %vm453, %v451, 0.0
        %v456 = vadd.f32 %v454, %v455
        %v457 = vsel %vm453, %v450, 0.0
        %v458 = vsel %vm453, %v452, 0.0
        %v459 = vadd.f32 %v457, %v458
        %v460 = vsel %vm453, %v456, 0.0
        %v461 = vrot.slane %v460, 4
        %v462 = vadd.f32 %v460, %v461
        %v463 = vrot.slane %v462, 2
        %v464 = vadd.f32 %v462, %v463
        %v465 = vrot.slane %v464, 1
        %v466 = vadd.f32 %v464, %v465
        %v467 = vsel %vm453, %v459, 0.0
        %v468 = vrot.slane %v467, 4
        %v469 = vadd.f32 %v467, %v468
        %v470 = vrot.slane %v469, 2
        %v471 = vadd.f32 %v469, %v470
        %v472 = vrot.slane %v471, 1
        %v473 = vadd.f32 %v471, %v472
        %v474 = vmul.f32 %v449, %v449
        %v475 = vmul.f32 %v450, %v450
        %v476 = vmul.f32 %v451, %v451
        %v477 = vmul.f32 %v452, %v452
        %v478 = vsel %vm453, %v474, 0.0
        %v479 = vsel %vm453, %v476, 0.0
        %v480 = vadd.f32 %v478, %v479
        %v481 = vsel %vm453, %v475, 0.0
        %v482 = vsel %vm453, %v477, 0.0
        %v483 = vadd.f32 %v481, %v482
        %v484 = vsel %vm453, %v480, 0.0
        %v485 = vrot.slane %v484, 4
        %v486 = vadd.f32 %v484, %v485
        %v487 = vrot.slane %v486, 2
        %v488 = vadd.f32 %v486, %v487
        %v489 = vrot.slane %v488, 1
        %v490 = vadd.f32 %v488, %v489
        %v491 = vsel %vm453, %v483, 0.0
        %v492 = vrot.slane %v491, 4
        %v493 = vadd.f32 %v491, %v492
        %v494 = vrot.slane %v493, 2
        %v495 = vadd.f32 %v493, %v494
        %v496 = vrot.slane %v495, 1
        %v497 = vadd.f32 %v495, %v496
        %500 = vrot.lane.b32.xlu0 %v466, 112
        %v501 = vpop.permute.xlu0 %500
        %502 = vrot.lane.b32.xlu0 %v473, 112
        %v503 = vpop.permute.xlu0 %502
        %v506 = vadd.f32 %v466, %v501
        %v507 = vadd.f32 %v473, %v503
        %508 = vrot.lane.b32.xlu0 %v466, 96
        %v509 = vpop.permute.xlu0 %508
        %510 = vrot.lane.b32.xlu0 %v473, 96
        %v511 = vpop.permute.xlu0 %510
        %v514 = vadd.f32 %v506, %v509
        %v515 = vadd.f32 %v507, %v511
        %516 = vrot.lane.b32.xlu0 %v466, 80
        %v517 = vpop.permute.xlu0 %516
        %518 = vrot.lane.b32.xlu0 %v473, 80
        %v519 = vpop.permute.xlu0 %518
        %v522 = vadd.f32 %v514, %v517
        %v523 = vadd.f32 %v515, %v519
        %524 = vrot.lane.b32.xlu0 %v466, 64
        %v525 = vpop.permute.xlu0 %524
        %526 = vrot.lane.b32.xlu0 %v473, 64
        %v527 = vpop.permute.xlu0 %526
        %v530 = vadd.f32 %v522, %v525
        %v531 = vadd.f32 %v523, %v527
        %532 = vrot.lane.b32.xlu0 %v466, 48
        %v533 = vpop.permute.xlu0 %532
        %534 = vrot.lane.b32.xlu0 %v473, 48
        %v535 = vpop.permute.xlu0 %534
        %v538 = vadd.f32 %v530, %v533
        %v539 = vadd.f32 %v531, %v535
        %540 = vrot.lane.b32.xlu0 %v466, 32
        %v541 = vpop.permute.xlu0 %540
        %542 = vrot.lane.b32.xlu0 %v473, 32
        %v543 = vpop.permute.xlu0 %542
        %v546 = vadd.f32 %v538, %v541
        %v547 = vadd.f32 %v539, %v543
        %548 = vrot.lane.b32.xlu0 %v466, 16
        %v549 = vpop.permute.xlu0 %548
        %550 = vrot.lane.b32.xlu0 %v473, 16
        %v551 = vpop.permute.xlu0 %550
        %v554 = vadd.f32 %v546, %v549
        %v555 = vadd.f32 %v547, %v551
        %v556 = vstv %s448
        %v557 = vmul.f32 %v554, %v556
        %v558 = vmul.f32 %v555, %v556
        %561 = vrot.lane.b32.xlu0 %v490, 112
        %v562 = vpop.permute.xlu0 %561
        %563 = vrot.lane.b32.xlu0 %v497, 112
        %v564 = vpop.permute.xlu0 %563
        %v567 = vadd.f32 %v490, %v562
        %v568 = vadd.f32 %v497, %v564
        %569 = vrot.lane.b32.xlu0 %v490, 96
        %v570 = vpop.permute.xlu0 %569
        %571 = vrot.lane.b32.xlu0 %v497, 96
        %v572 = vpop.permute.xlu0 %571
        %v575 = vadd.f32 %v567, %v570
        %v576 = vadd.f32 %v568, %v572
        %577 = vrot.lane.b32.xlu0 %v490, 80
        %v578 = vpop.permute.xlu0 %577
        %579 = vrot.lane.b32.xlu0 %v497, 80
        %v580 = vpop.permute.xlu0 %579
        %v583 = vadd.f32 %v575, %v578
        %v584 = vadd.f32 %v576, %v580
        %585 = vrot.lane.b32.xlu0 %v490, 64
        %v586 = vpop.permute.xlu0 %585
        %587 = vrot.lane.b32.xlu0 %v497, 64
        %v588 = vpop.permute.xlu0 %587
        %v591 = vadd.f32 %v583, %v586
        %v592 = vadd.f32 %v584, %v588
        %593 = vrot.lane.b32.xlu0 %v490, 48
        %v594 = vpop.permute.xlu0 %593
        %595 = vrot.lane.b32.xlu0 %v497, 48
        %v596 = vpop.permute.xlu0 %595
        %v599 = vadd.f32 %v591, %v594
        %v600 = vadd.f32 %v592, %v596
        %601 = vrot.lane.b32.xlu0 %v490, 32
        %v602 = vpop.permute.xlu0 %601
        %603 = vrot.lane.b32.xlu0 %v497, 32
        %v604 = vpop.permute.xlu0 %603
        %v607 = vadd.f32 %v599, %v602
        %v608 = vadd.f32 %v600, %v604
        %609 = vrot.lane.b32.xlu0 %v490, 16
        %v610 = vpop.permute.xlu0 %609
        %611 = vrot.lane.b32.xlu0 %v497, 16
        %v612 = vpop.permute.xlu0 %611
        %v615 = vadd.f32 %v607, %v610
        %v616 = vadd.f32 %v608, %v612
        %v617 = vmul.f32 %v615, %v556
        %v618 = vmul.f32 %v616, %v556
        %v619 = vmul.f32 %v557, %v557
        %v620 = vmul.f32 %v558, %v558
        %s621 = smul.f32 %s448, 32.0
        %s622 = ssub.f32 %s621, 2.0
        %v623 = vstv %s622
        %v624 = vmul.f32 %v619, %v623
        %v625 = vmul.f32 %v620, %v623
        %v626 = vadd.f32 %v617, %v624
        %v627 = vadd.f32 %v618, %v625
        %v628 = vld [vmem:[%s428] sm:$0x1]
        %v629 = vld [vmem:[%s428 + $0x1] sm:$0x1]
        %v630 = vmul.f32 %v628, 0.9
        %v631 = vmul.f32 %v629, 0.9
        %v632 = vmul.f32 %v557, 0.1
        %v633 = vmul.f32 %v558, 0.1
        %v634 = vadd.f32 %v630, %v632
        %v635 = vadd.f32 %v631, %v633
        %v636 = vld [vmem:[%s433] sm:$0x1]
        %v637 = vld [vmem:[%s433 + $0x1] sm:$0x1]
        %v638 = vmul.f32 %v636, 0.9
        %v639 = vmul.f32 %v637, 0.9
        %v640 = vmul.f32 %v626, 0.1
        %v641 = vmul.f32 %v627, 0.1
        %v642 = vadd.f32 %v638, %v640
        %v643 = vadd.f32 %v639, %v641
        %vm644 = vcmask 122880
        %645 = vst.msk [vmem:[%s416] sm:$0x1] %vm644, %v634
        %646 = vst.msk [vmem:[%s416 + $0x1] sm:$0x1] %vm644, %v635
        %647 = vst.msk [vmem:[%s423] sm:$0x1] %vm644, %v642
        %648 = vst.msk [vmem:[%s423 + $0x1] sm:$0x1] %vm644, %v643
        %v649 = vld [vmem:[%s438] sm:$0x1]
        %v650 = vld [vmem:[%s438 + $0x1] sm:$0x1]
        %v651 = vadd.f32 %v642, 1e-05
        %v652 = vadd.f32 %v643, 1e-05
        %v653 = vrsqrt.pop %v651
        %v654 = vrsqrt.pop %v652
        %v655 = vmul.f32 %v649, %v653
        %v656 = vmul.f32 %v650, %v654
        %v657 = vld [vmem:[%s443] sm:$0x1]
        %v658 = vld [vmem:[%s443 + $0x1] sm:$0x1]
        %v659 = vmul.f32 %v634, %v655
        %v660 = vmul.f32 %v635, %v656
        %v661 = vsub.f32 %v657, %v659
        %v662 = vsub.f32 %v658, %v660
        %v665 = vlaneseq
        %v666 = vshrl.u32 %v665, 7
        %v667 = vsub.s32 0, %v666
        %v668 = vrot.slane %v655, %v667
        %v669 = vlaneseq
        %v670 = vshrl.u32 %v669, 7
        %v671 = vsub.s32 0, %v670
        %v672 = vrot.slane %v656, %v671
        %673 = vrot.lane.b32.xlu0 %v668, 16
        %v674 = vpop.permute.xlu0 %673
        %675 = vrot.lane.b32.xlu0 %v672, 16
        %v676 = vpop.permute.xlu0 %675
        %679 = vrot.lane.b32.xlu0 %v668, 32
        %v680 = vpop.permute.xlu0 %679
        %681 = vrot.lane.b32.xlu0 %v672, 32
        %v682 = vpop.permute.xlu0 %681
        %685 = vrot.lane.b32.xlu0 %v668, 48
        %v686 = vpop.permute.xlu0 %685
        %687 = vrot.lane.b32.xlu0 %v672, 48
        %v688 = vpop.permute.xlu0 %687
        %691 = vrot.lane.b32.xlu0 %v668, 64
        %v692 = vpop.permute.xlu0 %691
        %693 = vrot.lane.b32.xlu0 %v672, 64
        %v694 = vpop.permute.xlu0 %693
        %697 = vrot.lane.b32.xlu0 %v668, 80
        %v698 = vpop.permute.xlu0 %697
        %699 = vrot.lane.b32.xlu0 %v672, 80
        %v700 = vpop.permute.xlu0 %699
        %703 = vrot.lane.b32.xlu0 %v668, 96
        %v704 = vpop.permute.xlu0 %703
        %705 = vrot.lane.b32.xlu0 %v672, 96
        %v706 = vpop.permute.xlu0 %705
        %709 = vrot.lane.b32.xlu0 %v668, 112
        %v710 = vpop.permute.xlu0 %709
        %711 = vrot.lane.b32.xlu0 %v672, 112
        %v712 = vpop.permute.xlu0 %711
        %vm715 = vcmask 130048
        %v716 = vsel %vm715, %v655, %v674
        %v717 = vsel %vm715, %v656, %v676
        %vm718 = vcmask 261120
        %v719 = vsel %vm718, %v716, %v680
        %v720 = vsel %vm718, %v717, %v682
        %vm721 = vcmask 392192
        %v722 = vsel %vm721, %v719, %v686
        %v723 = vsel %vm721, %v720, %v688
        %vm724 = vcmask 523264
        %v725 = vsel %vm724, %v722, %v692
        %v726 = vsel %vm724, %v723, %v694
        %vm727 = vcmask 654336
        %v728 = vsel %vm727, %v725, %v698
        %v729 = vsel %vm727, %v726, %v700
        %vm730 = vcmask 785408
        %v731 = vsel %vm730, %v728, %v704
        %v732 = vsel %vm730, %v729, %v706
        %vm733 = vcmask 916480
        %v734 = vsel %vm733, %v731, %v710
        %v735 = vsel %vm733, %v732, %v712
        %v736 = vlaneseq
        %v737 = vshrl.u32 %v736, 7
        %v738 = vsub.s32 0, %v737
        %v739 = vrot.slane %v734, %v738
        %v740 = vlaneseq
        %v741 = vshrl.u32 %v740, 7
        %v742 = vsub.s32 0, %v741
        %v743 = vrot.slane %v735, %v742
        %v744 = vmul.f32 %v449, %v739
        %v745 = vmul.f32 %v450, %v743
        %v746 = vmul.f32 %v451, %v739
        %v747 = vmul.f32 %v452, %v743
        %v750 = vlaneseq
        %v751 = vshrl.u32 %v750, 7
        %v752 = vsub.s32 0, %v751
        %v753 = vrot.slane %v661, %v752
        %v754 = vlaneseq
        %v755 = vshrl.u32 %v754, 7
        %v756 = vsub.s32 0, %v755
        %v757 = vrot.slane %v662, %v756
        %758 = vrot.lane.b32.xlu0 %v753, 16
        %v759 = vpop.permute.xlu0 %758
        %760 = vrot.lane.b32.xlu0 %v757, 16
        %v761 = vpop.permute.xlu0 %760
        %764 = vrot.lane.b32.xlu0 %v753, 32
        %v765 = vpop.permute.xlu0 %764
        %766 = vrot.lane.b32.xlu0 %v757, 32
        %v767 = vpop.permute.xlu0 %766
        %770 = vrot.lane.b32.xlu0 %v753, 48
        %v771 = vpop.permute.xlu0 %770
        %772 = vrot.lane.b32.xlu0 %v757, 48
        %v773 = vpop.permute.xlu0 %772
        %776 = vrot.lane.b32.xlu0 %v753, 64
        %v777 = vpop.permute.xlu0 %776
        %778 = vrot.lane.b32.xlu0 %v757, 64
        %v779 = vpop.permute.xlu0 %778
        %782 = vrot.lane.b32.xlu0 %v753, 80
        %v783 = vpop.permute.xlu0 %782
        %784 = vrot.lane.b32.xlu0 %v757, 80
        %v785 = vpop.permute.xlu0 %784
        %788 = vrot.lane.b32.xlu0 %v753, 96
        %v789 = vpop.permute.xlu0 %788
        %790 = vrot.lane.b32.xlu0 %v757, 96
        %v791 = vpop.permute.xlu0 %790
        %794 = vrot.lane.b32.xlu0 %v753, 112
        %v795 = vpop.permute.xlu0 %794
        %796 = vrot.lane.b32.xlu0 %v757, 112
        %v797 = vpop.permute.xlu0 %796
        %v800 = vsel %vm715, %v661, %v759
        %v801 = vsel %vm715, %v662, %v761
        %v802 = vsel %vm718, %v800, %v765
        %v803 = vsel %vm718, %v801, %v767
        %v804 = vsel %vm721, %v802, %v771
        %v805 = vsel %vm721, %v803, %v773
        %v806 = vsel %vm724, %v804, %v777
        %v807 = vsel %vm724, %v805, %v779
        %v808 = vsel %vm727, %v806, %v783
        %v809 = vsel %vm727, %v807, %v785
        %v810 = vsel %vm730, %v808, %v789
        %v811 = vsel %vm730, %v809, %v791
        %v812 = vsel %vm733, %v810, %v795
        %v813 = vsel %vm733, %v811, %v797
        %v814 = vlaneseq
        %v815 = vshrl.u32 %v814, 7
        %v816 = vsub.s32 0, %v815
        %v817 = vrot.slane %v812, %v816
        %v818 = vlaneseq
        %v819 = vshrl.u32 %v818, 7
        %v820 = vsub.s32 0, %v819
        %v821 = vrot.slane %v813, %v820
        %v822 = vadd.f32 %v744, %v817
        %v823 = vadd.f32 %v745, %v821
        %v824 = vadd.f32 %v746, %v817
        %v825 = vadd.f32 %v747, %v821
        %826 = vst [vmem:[%s409] sm:$0x3] %v822
        %827 = vst [vmem:[%s409 + $0x2] sm:$0x3] %v823
        %828 = vst [vmem:[%s409 + $0x4] sm:$0x3] %v824
        %829 = vst [vmem:[%s409 + $0x6] sm:$0x3] %v825
        %s830 = sand.u32 %s189, 1
        %s831 = scalar_lea.sflag [#allocation5], %s830
        %s832 = sand.u32 %s189, 1
        %s833 = smul.addr %s832, 8
        %s834 = scalar_lea.vmem [#allocation6], %s833
        %s835 = sand.u32 %s30, 1
        %s836 = scalar_lea.sflag [#allocation8], %s835
        %s837 = sand.u32 %s215, 1
        %s838 = smul.addr %s837, 2
        %s839 = scalar_lea.vmem [#allocation7], %s838
        %s840 = sand.u32 %s30, 1
        %s841 = scalar_lea.sflag [#allocation8], %s840
        %s842 = sand.u32 %s241, 1
        %s843 = smul.addr %s842, 2
        %s844 = scalar_lea.vmem [#allocation9], %s843
        // Predicated region
        $region49: #{tpu_custom_call.1} parent=43 // pred_check
          %p845 = pneg %p199
        $region50: #{tpu_custom_call.1} parent=43 // pred_check_branch
          %847 = sbr.rel (%p845) target = $region52
        $region51: #{tpu_custom_call.1} parent=43 // pred_region
          #allocation13 [shape = 'u32[6]{0}', space=smem, size = 0x18, scoped, tag = 'DMA stride descriptor']
          %s848 = smul.u32 2, %s30
          %s850 = ssub.s32 128, 128
          %851 = vsyncadd %s831, %s850
          %s852 = smul.addr %s848, 32
          %s853 = scalar_lea.hbm %s6, %s852
          %s855 = sshll.u32 1, 14
          %s856 = sxor.u32 4294967295, %s855
          %s859 = sshll.u32 7, 18
          %s860 = sxor.u32 4294967295, %s859
          %s861 = sand.u32 0, %s860
          %s863 = sor.u32 %s861, 0
          %s865 = sshll.u32 3, 24
          %s866 = sxor.u32 4294967295, %s865
          %s867 = sand.u32 %s863, %s866
          %s869 = sor.u32 %s867, 0
          %s870 = sshll.u32 %s834, 4
          %s871 = int_to_ptr.vmem [resolvable:$true] %s870
          %877 = sst [smem:[#allocation13]] 64
          %s878 = scalar_lea.smem [#allocation13], 1
          %879 = sst [smem:[%s878]] 128
          %s880 = scalar_lea.smem [#allocation13], 2
          %881 = sst [smem:[%s880]] 2
          %s882 = scalar_lea.smem [#allocation13], 3
          %883 = sst [smem:[%s882]] 32
          %s884 = scalar_lea.smem [#allocation13], 4
          %885 = sst [smem:[%s884]] 32
          %s886 = scalar_lea.smem [#allocation13], 5
          %887 = sst [smem:[%s886]] 2
          %889 = dma.general %s871, 128, %s853, %s831, [#allocation12], [#allocation13], %s869, 0
        $region52: #{tpu_custom_call.1} parent=43 // pred_fallthru
          _
        // Predicated region
        $region53: #{tpu_custom_call.1} parent=43 // pred_check
          %p890 = pneg %p225
        $region54: #{tpu_custom_call.1} parent=43 // pred_check_branch
          %892 = sbr.rel (%p890) target = $region56
        $region55: #{tpu_custom_call.1} parent=43 // pred_region
          %s893 = smul.u32 2, %s30
          %s895 = ssub.s32 32, 32
          %896 = vsyncadd %s836, %s895
          %s897 = smul.addr %s893, 16
          %s898 = scalar_lea.hbm %s7, %s897
          %s899 = sshll.u32 %s839, 4
          %s900 = int_to_ptr.vmem [resolvable:$true] %s899
          %905 = dma.vmem_to_hbm [thread:$0]  %s900, 32, %s898, %s836, 16, 16, 1
        $region56: #{tpu_custom_call.1} parent=43 // pred_fallthru
          _
        // Predicated region
        $region57: #{tpu_custom_call.1} parent=43 // pred_check
          %p906 = pneg %p251
        $region58: #{tpu_custom_call.1} parent=43 // pred_check_branch
          %908 = sbr.rel (%p906) target = $region60
        $region59: #{tpu_custom_call.1} parent=43 // pred_region
          %s909 = smul.u32 2, %s30
          %s911 = ssub.s32 32, 32
          %912 = vsyncadd %s841, %s911
          %s913 = smul.addr %s909, 16
          %s914 = scalar_lea.hbm %s8, %s913
          %s915 = sshll.u32 %s844, 4
          %s916 = int_to_ptr.vmem [resolvable:$true] %s915
          %921 = dma.vmem_to_hbm [thread:$0]  %s916, 32, %s914, %s841, 16, 16, 1
        $region60: #{tpu_custom_call.1} parent=43 // pred_fallthru
          _
      $region44: #{tpu_custom_call.1} parent=5 // pred_fallthru
        _
      %p922 = scmp.le.s32.totalorder 2, %s25
      // Predicated region
      $region61: #{tpu_custom_call.1} parent=5 // pred_check
        %p923 = pneg %p922
      $region62: #{tpu_custom_call.1} parent=5 // pred_check_branch
        %925 = sbr.rel (%p923) target = $region64
      $region63: #{tpu_custom_call.1} parent=5 // pred_region
        %s926 = ssub.s32 %s25, 2
        // Predicated region
        $region65: #{tpu_custom_call.1} parent=63 // pred_check
          %p927 = pneg %p205
        $region66: #{tpu_custom_call.1} parent=63 // pred_check_branch
          %929 = sbr.rel (%p927) target = $region68
        $region67: #{tpu_custom_call.1} parent=63 // pred_region
          %s930 = sand.u32 %s190, 1
          %s931 = scalar_lea.sflag [#allocation5], %s930
          %s932 = sand.u32 %s190, 1
          %s933 = smul.addr %s932, 8
          %s934 = scalar_lea.vmem [#allocation6], %s933
          %935 = dma.done %s931, 128
        $region68: #{tpu_custom_call.1} parent=63 // pred_fallthru
          _
        // Predicated region
        $region69: #{tpu_custom_call.1} parent=63 // pred_check
          %p936 = pneg %p231
        $region70: #{tpu_custom_call.1} parent=63 // pred_check_branch
          %938 = sbr.rel (%p936) target = $region72
        $region71: #{tpu_custom_call.1} parent=63 // pred_region
          %s939 = sand.u32 %s31, 1
          %s940 = scalar_lea.sflag [#allocation8], %s939
          %s941 = sand.u32 %s216, 1
          %s942 = smul.addr %s941, 2
          %s943 = scalar_lea.vmem [#allocation7], %s942
          %944 = dma.done %s940, 32
        $region72: #{tpu_custom_call.1} parent=63 // pred_fallthru
          _
        // Predicated region
        $region73: #{tpu_custom_call.1} parent=63 // pred_check
          %p945 = pneg %p257
        $region74: #{tpu_custom_call.1} parent=63 // pred_check_branch
          %947 = sbr.rel (%p945) target = $region76
        $region75: #{tpu_custom_call.1} parent=63 // pred_region
          %s948 = sand.u32 %s31, 1
          %s949 = scalar_lea.sflag [#allocation8], %s948
          %s950 = sand.u32 %s242, 1
          %s951 = smul.addr %s950, 2
          %s952 = scalar_lea.vmem [#allocation9], %s951
          %953 = dma.done %s949, 32
        $region76: #{tpu_custom_call.1} parent=63 // pred_fallthru
          _
      $region64: #{tpu_custom_call.1} parent=5 // pred_fallthru
        _
    $region6: #{tpu_custom_call.1} parent=1 // loop_footer
      %s29 = sadd.s32 1, %s25
    $region7: #{tpu_custom_call.1} parent=1 // loop_footer_branch
      %24 = sbr.rel target = $region3
    $region8: #{tpu_custom_call.1} parent=1 // loop_exit
      _
    %954 = vsyncpa [#allocation4], 1
    %s955 = scalar_lea.sflag [#allocation4], 1
    %956 = vsyncpa %s955, 1
    %957 = vsyncpa [#allocation5], 1
    %s958 = scalar_lea.sflag [#allocation5], 1
    %959 = vsyncpa %s958, 1
    %960 = vsyncpa [#allocation8], 1
    %s961 = scalar_lea.sflag [#allocation8], 1
    %962 = vsyncpa %s961, 1

</llo_original>
